<compile_context>
chip_gen: v6e
topology: v6e:2x2x1
jax: 0.10.0
libtpu: 0.0.40
codegen_flags: <defaults>
</compile_context>

<pallas_src>
import functools
import itertools

import numpy as np
import jax
import jax.numpy as jnp
from jax import lax
from jax.experimental import pallas as pl
from jax.experimental.pallas import tpu as pltpu

try:
    from scipy.optimize import linear_sum_assignment as _linear_sum_assignment
except Exception:  # pragma: no cover - scipy optional
    _linear_sum_assignment = None

_NEG_FILL = -1e30   # fill for padded class logits (exp -> 0, keeps LSE finite)
_BIG_COST = 1e9     # matching cost assigned to padded target columns
_EPS = 1e-8


def _round_up(x, m):
    return ((x + m - 1) // m) * m


# ---------------------------------------------------------------------------
# Kernel 1: pairwise matching cost, lane-dense over (padded) targets
# ---------------------------------------------------------------------------
def _cost_kernel(logits_ref, pbox_ref, tboxT_ref, tlab_ref, tmask_ref, cost_ref):
    # logits_ref : (Bt, Q, C1p) f32, padded classes filled with _NEG_FILL
    # pbox_ref   : (Bt, Q, 4)   f32 predicted boxes, normalized cxcywh
    # tboxT_ref  : (Bt, 4, Tp)  f32 target boxes, rows = cx, cy, w, h (normalized)
    # tlab_ref   : (Bt, 1, Tp)  i32 target labels (padded cols = C1p, never match)
    # tmask_ref  : (Bt, 1, Tp)  f32 1.0 for valid target column, 0.0 for padding
    # cost_ref   : (Bt, Q, Tp)  f32 pairwise matching cost
    logits = logits_ref[...]
    pbox = pbox_ref[...]
    tboxT = tboxT_ref[...]
    tlab = tlab_ref[...]
    tmask = tmask_ref[...]

    Bt, Q, C1p = logits.shape
    Tp = tboxT.shape[2]

    # softmax over the (padded, lane-dense) class dim; EUP reciprocal for denom
    m = jnp.max(logits, axis=-1, keepdims=True)
    e = jnp.exp(logits - m)
    prob = e * pl.reciprocal(jnp.sum(e, axis=-1, keepdims=True), approx=True)

    # cost_class[q, t] = -prob[q, label_t]  via one-hot + MXU matmul
    cls_iota = lax.broadcasted_iota(jnp.int32, (C1p, Tp), 0)[None]     # (1, C1p, Tp)
    onehot = (cls_iota == tlab).astype(jnp.float32)                    # (Bt, C1p, Tp)
    cost_class = -jnp.einsum('bqc,bct->bqt', prob, onehot,
                             preferred_element_type=jnp.float32)

    # cost_bbox[q, t] = sum_k |pred[q,k] - tgt[t,k]|  (cxcywh, 4 lane-dense passes)
    cost_bbox = jnp.zeros((Bt, Q, Tp), jnp.float32)
    for k in range(4):
        cost_bbox = cost_bbox + jnp.abs(pbox[:, :, k:k + 1] - tboxT[:, k:k + 1, :])

    # pairwise GIoU (cxcywh -> xyxy), broadcasting (Bt,Q,1) vs (Bt,1,Tp)
    pcx, pcy, pw, ph = (pbox[:, :, 0:1], pbox[:, :, 1:2],
                        pbox[:, :, 2:3], pbox[:, :, 3:4])
    px1, py1 = pcx - 0.5 * pw, pcy - 0.5 * ph
    px2, py2 = pcx + 0.5 * pw, pcy + 0.5 * ph
    tcx, tcy, tw, th = (tboxT[:, 0:1, :], tboxT[:, 1:2, :],
                        tboxT[:, 2:3, :], tboxT[:, 3:4, :])
    tx1, ty1 = tcx - 0.5 * tw, tcy - 0.5 * th
    tx2, ty2 = tcx + 0.5 * tw, tcy + 0.5 * th

    area_p = (px2 - px1) * (py2 - py1)
    area_t = (tx2 - tx1) * (ty2 - ty1)
    iw = jnp.maximum(jnp.minimum(px2, tx2) - jnp.maximum(px1, tx1), 0.0)
    ih = jnp.maximum(jnp.minimum(py2, ty2) - jnp.maximum(py1, ty1), 0.0)
    inter = iw * ih
    union = area_p + area_t - inter
    iou = inter * pl.reciprocal(jnp.maximum(union, _EPS), approx=True)
    ew = jnp.maximum(px2, tx2) - jnp.minimum(px1, tx1)
    eh = jnp.maximum(py2, ty2) - jnp.minimum(py1, ty1)
    enc = jnp.maximum(ew * eh, _EPS)
    giou = iou - (enc - union) * pl.reciprocal(enc, approx=True)

    # TODO(synk): HungarianMatcher per-term cost weights not given in the source;
    # assumed 1.0 each (original DETR uses 1 / 5 / 2).
    cost = cost_class + cost_bbox - giou
    cost_ref[...] = jnp.where(tmask > 0.5, cost, _BIG_COST)   # mask padded targets


def _compute_cost_matrices(logits_pad, pbox, tboxT_pad, tlab_pad, tmask,
                           batch_block=1):
    B, Q, C1p = logits_pad.shape
    Tp = tboxT_pad.shape[2]
    Bt = batch_block
    assert B % Bt == 0
    return pl.pallas_call(
        _cost_kernel,
        out_shape=jax.ShapeDtypeStruct((B, Q, Tp), jnp.float32),
        grid=(B // Bt,),
        in_specs=[
            pl.BlockSpec((Bt, Q, C1p), lambda b: (b, 0, 0)),
            pl.BlockSpec((Bt, Q, 4), lambda b: (b, 0, 0)),
            pl.BlockSpec((Bt, 4, Tp), lambda b: (b, 0, 0)),
            pl.BlockSpec((Bt, 1, Tp), lambda b: (b, 0, 0)),
            pl.BlockSpec((Bt, 1, Tp), lambda b: (b, 0, 0)),
        ],
        out_specs=pl.BlockSpec((Bt, Q, Tp), lambda b: (b, 0, 0)),
        # Batch axis stays "parallel" so v7x's two TensorCores split the images;
        # on single-TC parts (v5e/v6e) raise batch_block to amortize step overhead.
        compiler_params=pltpu.CompilerParams(dimension_semantics=("parallel",)),
    )(logits_pad, pbox, tboxT_pad, tlab_pad, tmask)


# ---------------------------------------------------------------------------
# Kernel 2: fused weighted CE + L1 + GIoU losses -> scalar
# ---------------------------------------------------------------------------
def _loss_kernel(w_label, w_l1, w_giou, inv_4n, inv_n,
                 logits_ref, lab_ref, clsw_ref, pboxT_ref, tboxT_ref, bmask_ref,
                 out_ref):
    # logits_ref : (Mp, C1p) f32  (M = B*Q rows; padded rows/classes = _NEG_FILL)
    # lab_ref    : (Mp, 1)   i32  (unmatched queries = no-object class,
    #                             padded rows = a zero-weight padded class)
    # clsw_ref   : (1, C1p)  f32  class weights (padded classes have weight 0)
    # pboxT_ref  : (4, Np)   f32  matched predicted boxes, rows = cx, cy, w, h
    # tboxT_ref  : (4, Np)   f32  matched target boxes, rows = cx, cy, w, h
    # bmask_ref  : (1, Np)   f32  1.0 for real matched pairs, 0.0 for padding
    # out_ref    : (1, 1)    f32  total loss
    lg = logits_ref[...]
    lab = lab_ref[...]
    clsw = clsw_ref[...]
    Mp, C1p = lg.shape

    # weighted cross-entropy, torch 'mean' semantics: sum(w*ce) / sum(w)
    m = jnp.max(lg, axis=-1, keepdims=True)
    lse = m + jnp.log(jnp.sum(jnp.exp(lg - m), axis=-1, keepdims=True))      # (Mp,1)
    cls_iota = lax.broadcasted_iota(jnp.int32, (Mp, C1p), 1)
    onehot = (cls_iota == lab).astype(jnp.float32)                           # (Mp,C1p)
    logit_y = jnp.sum(onehot * lg, axis=-1, keepdims=True)
    w_y = jnp.sum(onehot * clsw, axis=-1, keepdims=True)
    ce = lse - logit_y
    loss_labels = jnp.sum(w_y * ce) / jnp.sum(w_y)

    # L1 loss: mean over all 4*N elements of the matched boxes (lane-dense rows)
    pb = pboxT_ref[...]
    tb = tboxT_ref[...]
    msk = bmask_ref[...]
    loss_l1 = jnp.sum(jnp.abs(pb - tb) * msk) * inv_4n

    # GIoU loss: mean(1 - giou) over the N matched pairs (cxcywh -> xyxy rows)
    pcx, pcy, pw, ph = pb[0:1, :], pb[1:2, :], pb[2:3, :], pb[3:4, :]
    px1, py1 = pcx - 0.5 * pw, pcy - 0.5 * ph
    px2, py2 = pcx + 0.5 * pw, pcy + 0.5 * ph
    tcx, tcy, tw, th = tb[0:1, :], tb[1:2, :], tb[2:3, :], tb[3:4, :]
    tx1, ty1 = tcx - 0.5 * tw, tcy - 0.5 * th
    tx2, ty2 = tcx + 0.5 * tw, tcy + 0.5 * th
    area_p = (px2 - px1) * (py2 - py1)
    area_t = (tx2 - tx1) * (ty2 - ty1)
    iw = jnp.maximum(jnp.minimum(px2, tx2) - jnp.maximum(px1, tx1), 0.0)
    ih = jnp.maximum(jnp.minimum(py2, ty2) - jnp.maximum(py1, ty1), 0.0)
    inter = iw * ih
    union = area_p + area_t - inter
    iou = inter * pl.reciprocal(jnp.maximum(union, _EPS), approx=True)
    ew = jnp.maximum(px2, tx2) - jnp.minimum(px1, tx1)
    eh = jnp.maximum(py2, ty2) - jnp.minimum(py1, ty1)
    enc = jnp.maximum(ew * eh, _EPS)
    giou = iou - (enc - union) * pl.reciprocal(enc, approx=True)
    loss_giou = jnp.sum((1.0 - giou) * msk) * inv_n

    # TODO(synk): at production scale (B*Q ~ 20k rows) tile this kernel over rows
    # with a pl.when-finalized SMEM accumulator and explicit vmem_limit (v7x: 64 MiB).
    out_ref[0, 0] = w_label * loss_labels + w_l1 * loss_l1 + w_giou * loss_giou


def _compute_loss(logits2d, labels2d, clsw, mpredT, mtgtT, bmask,
                  w_label, w_l1, w_giou, inv_4n, inv_n):
    Mp, C1p = logits2d.shape
    Np = mpredT.shape[1]
    kern = functools.partial(_loss_kernel, w_label, w_l1, w_giou, inv_4n, inv_n)
    out = pl.pallas_call(
        kern,
        out_shape=jax.ShapeDtypeStruct((1, 1), jnp.float32),
        grid=(1,),
        in_specs=[
            pl.BlockSpec((Mp, C1p), lambda i: (0, 0)),
            pl.BlockSpec((Mp, 1), lambda i: (0, 0)),
            pl.BlockSpec((1, C1p), lambda i: (0, 0)),
            pl.BlockSpec((4, Np), lambda i: (0, 0)),
            pl.BlockSpec((4, Np), lambda i: (0, 0)),
            pl.BlockSpec((1, Np), lambda i: (0, 0)),
        ],
        out_specs=pl.BlockSpec((1, 1), lambda i: (0, 0)),
    )(logits2d, labels2d, clsw, mpredT, mtgtT, bmask)
    return out[0, 0]


# ---------------------------------------------------------------------------
# Host-side assignment (Hungarian via scipy; exact exhaustive fallback)
# ---------------------------------------------------------------------------
def _assign(cost):
    # cost: (Q, T) numpy with Q >= T. Returns perm with perm[t] = matched query.
    Q, T = cost.shape
    if _linear_sum_assignment is not None:
        rows, cols = _linear_sum_assignment(cost)
        perm = [0] * T
        for r, c in zip(rows, cols):
            perm[int(c)] = int(r)
        return tuple(perm)
    # exact exhaustive fallback (only viable for tiny Q, T)
    best_perm, best_cost = None, None
    for p in itertools.permutations(range(Q), T):
        c = sum(cost[p[t], t] for t in range(T))
        if best_cost is None or c < best_cost:
            best_cost, best_perm = c, p
    return best_perm


# ---------------------------------------------------------------------------
# SetCriterion wrapper
# ---------------------------------------------------------------------------
class SetCriterion:
    def __init__(self, num_classes, w_label=1.0, w_bbox_l1=1.0, w_bbox_giou=1.0,
                 coef_eos=0.1):
        self.num_classes = int(num_classes)
        self.w_label = float(w_label)
        self.w_bbox_l1 = float(w_bbox_l1)
        self.w_bbox_giou = float(w_bbox_giou)
        c1 = self.num_classes + 1
        # lane-pad class dim to a multiple of 128, keeping >=1 zero-weight pad class
        self.c1p = _round_up(c1 + 1, 128)
        cw = np.zeros((1, self.c1p), np.float32)
        cw[0, :self.num_classes] = 1.0
        cw[0, self.num_classes] = float(coef_eos)
        self.cls_weights = jnp.asarray(cw)

    def __call__(self, logits, pred_bboxes, src_shapes, tgt_labels, tgt_bboxes,
                 sizes, batch_block=1):
        logits = np.asarray(logits, np.float32)
        pred_np = np.asarray(pred_bboxes, np.float32)
        src_shapes = np.asarray(src_shapes)
        tgt_labels = np.asarray(tgt_labels, np.int64)
        tgt_bboxes = np.asarray(tgt_bboxes, np.float32)

        B, Q, C1 = logits.shape
        C1p = self.c1p
        sizes = tuple(int(s) for s in sizes)
        offs = np.concatenate([[0], np.cumsum(sizes)]).astype(np.int64)
        Tmax = max(sizes) if sizes else 0
        Tp = _round_up(max(Tmax, 1), 128)

        # host glue: pad class dim; targets absolute xyxy -> normalized cxcywh
        logits_pad = np.full((B, Q, C1p), _NEG_FILL, np.float32)
        logits_pad[:, :, :C1] = logits

        tboxT_pad = np.zeros((B, 4, Tp), np.float32)     # rows = cx, cy, w, h
        tbox_cxcywh = np.zeros((B, Tp, 4), np.float32)
        tlab_pad = np.full((B, 1, Tp), C1p, np.int32)    # padded label never matches
        tmask = np.zeros((B, 1, Tp), np.float32)
        for b in range(B):
            n = sizes[b]
            if n == 0:
                continue
            tb = tgt_bboxes[offs[b]:offs[b + 1]]
            H, W = float(src_shapes[b, 1]), float(src_shapes[b, 2])
            x1, y1, x2, y2 = tb[:, 0] / W, tb[:, 1] / H, tb[:, 2] / W, tb[:, 3] / H
            cxcywh = np.stack([(x1 + x2) / 2, (y1 + y2) / 2, x2 - x1, y2 - y1], -1)
            tbox_cxcywh[b, :n] = cxcywh
            tboxT_pad[b, :, :n] = cxcywh.T
            tlab_pad[b, 0, :n] = tgt_labels[offs[b]:offs[b + 1]]
            tmask[b, 0, :n] = 1.0

        # Pallas kernel 1: pairwise matching costs (lane-dense over targets)
        costs = _compute_cost_matrices(
            jnp.asarray(logits_pad), jnp.asarray(pred_np),
            jnp.asarray(tboxT_pad), jnp.asarray(tlab_pad), jnp.asarray(tmask),
            batch_block=batch_block)
        costs = np.asarray(jax.device_get(costs))

        # TODO(synk): linear-sum assignment is combinatorial with no clean Pallas
        # equivalent; solved host-side (scipy Hungarian), costing one device sync.
        matched_labels = np.full((B, Q), self.num_classes, np.int32)  # no-object
        mpred, mtgt = [], []
        for b in range(B):
            n = sizes[b]
            if n == 0:
                continue
            perm = _assign(costs[b, :, :n])
            for t in range(n):
                q = perm[t]
                matched_labels[b, q] = int(tlab_pad[b, 0, t])
                mpred.append(pred_np[b, q])
                mtgt.append(tbox_cxcywh[b, t])

        # matched boxes as (4, Np) coordinate rows, lane-padded + masked
        N = len(mpred)
        Np = _round_up(max(N, 1), 128)
        dummy = np.array([0.5, 0.5, 1.0, 1.0], np.float32)
        mpredT = np.tile(dummy[:, None], (1, Np)).astype(np.float32)
        mtgtT = np.tile(dummy[:, None], (1, Np)).astype(np.float32)
        bmask = np.zeros((1, Np), np.float32)
        if N > 0:
            mpredT[:, :N] = np.stack(mpred, axis=0).T
            mtgtT[:, :N] = np.stack(mtgt, axis=0).T
            bmask[0, :N] = 1.0
        inv_n = 1.0 / N if N > 0 else 0.0
        inv_4n = 1.0 / (4.0 * N) if N > 0 else 0.0

        # matched logits = all query logits; unmatched queries -> no-object class
        M = B * Q
        Mp = _round_up(M, 8)
        logits2d = np.full((Mp, C1p), _NEG_FILL, np.float32)
        logits2d[:M] = logits_pad.reshape(M, C1p)
        labels2d = np.full((Mp, 1), C1, np.int32)   # padded rows -> zero-weight class
        labels2d[:M, 0] = matched_labels.reshape(M)

        # Pallas kernel 2: fused weighted CE + L1 + GIoU losses
        return _compute_loss(
            jnp.asarray(logits2d), jnp.asarray(labels2d), self.cls_weights,
            jnp.asarray(mpredT), jnp.asarray(mtgtT), jnp.asarray(bmask),
            self.w_label, self.w_bbox_l1, self.w_bbox_giou, inv_4n, inv_n)


# ---------------------------------------------------------------------------
# Example run
# ---------------------------------------------------------------------------
if __name__ == "__main__":
    key = jax.random.PRNGKey(0)
    B, Q, num_classes = 2, 8, 3
    C1 = num_classes + 1
    sizes = (2, 3)
    N = sum(sizes)

    k1, k2, k3, k4, k5 = jax.random.split(key, 5)
    logits = jax.random.normal(k1, (B, Q, C1), jnp.float32) * 2.0
    cxy = jax.random.uniform(k2, (B, Q, 2), jnp.float32, 0.25, 0.75)
    wh = jax.random.uniform(k3, (B, Q, 2), jnp.float32, 0.1, 0.3)
    pred_bboxes = jnp.concatenate([cxy, wh], axis=-1)

    src_shapes = np.array([[3, 224, 224], [3, 448, 448]], np.int32)
    tgt_labels = np.asarray(jax.random.randint(k4, (N,), 0, num_classes, jnp.int32))

    # build target boxes in the fixture's absolute-xyxy format
    tcxy = np.asarray(jax.random.uniform(k5, (N, 2), jnp.float32, 0.3, 0.7))
    twh = np.full((N, 2), 0.2, np.float32)
    tgt_cxcywh = np.concatenate([tcxy, twh], axis=-1)
    tgt_bboxes = np.zeros((N, 4), np.float32)
    off = 0
    for b in range(B):
        H, W = float(src_shapes[b, 1]), float(src_shapes[b, 2])
        for _ in range(sizes[b]):
            cx, cy, w, h = tgt_cxcywh[off]
            tgt_bboxes[off] = [(cx - w / 2) * W, (cy - h / 2) * H,
                               (cx + w / 2) * W, (cy + h / 2) * H]
            off += 1

    criterion = SetCriterion(num_classes=num_classes)
    loss = criterion(logits, pred_bboxes, src_shapes, tgt_labels, tgt_bboxes, sizes)
    loss = jax.block_until_ready(loss)
    assert np.isfinite(float(loss))
    print("KERNEL_OK")
</pallas_src>

<mosaic_0001>
module attributes {stable_mosaic.version = 11 : i64} {
  func.func @_cost_kernel(%arg0: i32, %arg1: memref<1x8x128xf32, #tpu.memory_space<vmem>>, %arg2: memref<1x8x4xf32, #tpu.memory_space<vmem>>, %arg3: memref<1x4x128xf32, #tpu.memory_space<vmem>>, %arg4: memref<1x1x128xi32, #tpu.memory_space<vmem>>, %arg5: memref<1x1x128xf32, #tpu.memory_space<vmem>>, %arg6: memref<1x8x128xf32, #tpu.memory_space<vmem>>) attributes {dimension_semantics = [#tpu.dimension_semantics<parallel>], iteration_bounds = array<i64: 2>, scalar_prefetch = 0 : i64, scratch_operands = 0 : i64, tpu.core_type = #tpu.core_type<tc>, window_params = [{transform_indices = @transform_0, window_bounds = array<i64: 1, 8, 128>}, {transform_indices = @transform_1, window_bounds = array<i64: 1, 8, 4>}, {transform_indices = @transform_2, window_bounds = array<i64: 1, 4, 128>}, {transform_indices = @transform_3, window_bounds = array<i64: 1, 1, 128>}, {transform_indices = @transform_4, window_bounds = array<i64: 1, 1, 128>}, {transform_indices = @transform_5, window_bounds = array<i64: 1, 8, 128>}]} {
    %c0 = arith.constant 0 : index
    %c0_0 = arith.constant 0 : index
    %c0_1 = arith.constant 0 : index
    %0 = vector.load %arg1[%c0, %c0_0, %c0_1] : memref<1x8x128xf32, #tpu.memory_space<vmem>>, vector<1x8x128xf32>
    %c0_2 = arith.constant 0 : index
    %c0_3 = arith.constant 0 : index
    %c0_4 = arith.constant 0 : index
    %1 = vector.load %arg2[%c0_2, %c0_3, %c0_4] : memref<1x8x4xf32, #tpu.memory_space<vmem>>, vector<1x8x4xf32>
    %c0_5 = arith.constant 0 : index
    %c0_6 = arith.constant 0 : index
    %c0_7 = arith.constant 0 : index
    %2 = vector.load %arg3[%c0_5, %c0_6, %c0_7] : memref<1x4x128xf32, #tpu.memory_space<vmem>>, vector<1x4x128xf32>
    %c0_8 = arith.constant 0 : index
    %c0_9 = arith.constant 0 : index
    %c0_10 = arith.constant 0 : index
    %3 = vector.load %arg4[%c0_8, %c0_9, %c0_10] : memref<1x1x128xi32, #tpu.memory_space<vmem>>, vector<1x1x128xi32>
    %c0_11 = arith.constant 0 : index
    %c0_12 = arith.constant 0 : index
    %c0_13 = arith.constant 0 : index
    %4 = vector.load %arg5[%c0_11, %c0_12, %c0_13] : memref<1x1x128xf32, #tpu.memory_space<vmem>>, vector<1x1x128xf32>
    %cst = arith.constant dense<0xFF800000> : vector<1x8xf32>
    %5 = vector.multi_reduction <maximumf>, %0, %cst [2] : vector<1x8x128xf32> to vector<1x8xf32>
    %6 = vector.shape_cast %5 : vector<1x8xf32> to vector<1x8x1xf32>
    %7 = vector.broadcast %6 : vector<1x8x1xf32> to vector<1x8x128xf32>
    %8 = arith.subf %0, %7 : vector<1x8x128xf32>
    %9 = math.exp %8 : vector<1x8x128xf32>
    %cst_14 = arith.constant dense<0.000000e+00> : vector<1x8xf32>
    %10 = vector.multi_reduction <add>, %9, %cst_14 [2] : vector<1x8x128xf32> to vector<1x8xf32>
    %11 = vector.shape_cast %10 : vector<1x8xf32> to vector<1x8x1xf32>
    %12 = tpu.reciprocal %11 {approx = true} : vector<1x8x1xf32> -> vector<1x8x1xf32>
    %13 = vector.broadcast %12 : vector<1x8x1xf32> to vector<1x8x128xf32>
    %14 = arith.mulf %9, %13 : vector<1x8x128xf32>
    %15 = tpu.iota {dimensions = array<i32: 0>} : vector<128x128xi32>
    %16 = vector.shape_cast %15 : vector<128x128xi32> to vector<1x128x128xi32>
    %17 = vector.broadcast %3 : vector<1x1x128xi32> to vector<1x128x128xi32>
    %18 = arith.cmpi eq, %16, %17 : vector<1x128x128xi32>
    %19 = arith.extui %18 : vector<1x128x128xi1> to vector<1x128x128xi32>
    %20 = arith.sitofp %19 : vector<1x128x128xi32> to vector<1x128x128xf32>
    "tpu.trace_start"() <{level = 10 : i32, message = "bqc,bct->bqt"}> : () -> ()
    %cst_15 = arith.constant dense<0.000000e+00> : vector<1x8x128xf32>
    %21 = tpu.matmul %14, %20, %cst_15 {dimension_numbers = #tpu.dot_dimension_numbers<[2], [1], [1], [2], [0, 0, 0, 1, 1, 2], [0], [0]>} : vector<1x8x128xf32>, vector<1x128x128xf32>, vector<1x8x128xf32> -> vector<1x8x128xf32>
    "tpu.trace_stop"() : () -> ()
    %cst_16 = arith.constant 0.000000e+00 : f32
    %22 = vector.broadcast %cst_16 : f32 to vector<1x8x128xf32>
    %23 = arith.subf %22, %21 : vector<1x8x128xf32>
    %cst_17 = arith.constant 0.000000e+00 : f32
    %24 = vector.broadcast %cst_17 : f32 to vector<1x8x128xf32>
    %25 = vector.extract_strided_slice %1 {offsets = [0, 0, 0], sizes = [1, 8, 1], strides = [1, 1, 1]} : vector<1x8x4xf32> to vector<1x8x1xf32>
    %26 = vector.extract_strided_slice %2 {offsets = [0, 0, 0], sizes = [1, 1, 128], strides = [1, 1, 1]} : vector<1x4x128xf32> to vector<1x1x128xf32>
    %27 = vector.broadcast %25 : vector<1x8x1xf32> to vector<1x8x128xf32>
    %28 = vector.broadcast %26 : vector<1x1x128xf32> to vector<1x8x128xf32>
    %29 = arith.subf %27, %28 : vector<1x8x128xf32>
    %30 = math.absf %29 : vector<1x8x128xf32>
    %31 = arith.addf %24, %30 : vector<1x8x128xf32>
    %32 = vector.extract_strided_slice %1 {offsets = [0, 0, 1], sizes = [1, 8, 1], strides = [1, 1, 1]} : vector<1x8x4xf32> to vector<1x8x1xf32>
    %33 = vector.extract_strided_slice %2 {offsets = [0, 1, 0], sizes = [1, 1, 128], strides = [1, 1, 1]} : vector<1x4x128xf32> to vector<1x1x128xf32>
    %34 = vector.broadcast %32 : vector<1x8x1xf32> to vector<1x8x128xf32>
    %35 = vector.broadcast %33 : vector<1x1x128xf32> to vector<1x8x128xf32>
    %36 = arith.subf %34, %35 : vector<1x8x128xf32>
    %37 = math.absf %36 : vector<1x8x128xf32>
    %38 = arith.addf %31, %37 : vector<1x8x128xf32>
    %39 = vector.extract_strided_slice %1 {offsets = [0, 0, 2], sizes = [1, 8, 1], strides = [1, 1, 1]} : vector<1x8x4xf32> to vector<1x8x1xf32>
    %40 = vector.extract_strided_slice %2 {offsets = [0, 2, 0], sizes = [1, 1, 128], strides = [1, 1, 1]} : vector<1x4x128xf32> to vector<1x1x128xf32>
    %41 = vector.broadcast %39 : vector<1x8x1xf32> to vector<1x8x128xf32>
    %42 = vector.broadcast %40 : vector<1x1x128xf32> to vector<1x8x128xf32>
    %43 = arith.subf %41, %42 : vector<1x8x128xf32>
    %44 = math.absf %43 : vector<1x8x128xf32>
    %45 = arith.addf %38, %44 : vector<1x8x128xf32>
    %46 = vector.extract_strided_slice %1 {offsets = [0, 0, 3], sizes = [1, 8, 1], strides = [1, 1, 1]} : vector<1x8x4xf32> to vector<1x8x1xf32>
    %47 = vector.extract_strided_slice %2 {offsets = [0, 3, 0], sizes = [1, 1, 128], strides = [1, 1, 1]} : vector<1x4x128xf32> to vector<1x1x128xf32>
    %48 = vector.broadcast %46 : vector<1x8x1xf32> to vector<1x8x128xf32>
    %49 = vector.broadcast %47 : vector<1x1x128xf32> to vector<1x8x128xf32>
    %50 = arith.subf %48, %49 : vector<1x8x128xf32>
    %51 = math.absf %50 : vector<1x8x128xf32>
    %52 = arith.addf %45, %51 : vector<1x8x128xf32>
    %53 = vector.extract_strided_slice %1 {offsets = [0, 0, 0], sizes = [1, 8, 1], strides = [1, 1, 1]} : vector<1x8x4xf32> to vector<1x8x1xf32>
    %54 = vector.extract_strided_slice %1 {offsets = [0, 0, 1], sizes = [1, 8, 1], strides = [1, 1, 1]} : vector<1x8x4xf32> to vector<1x8x1xf32>
    %55 = vector.extract_strided_slice %1 {offsets = [0, 0, 2], sizes = [1, 8, 1], strides = [1, 1, 1]} : vector<1x8x4xf32> to vector<1x8x1xf32>
    %56 = vector.extract_strided_slice %1 {offsets = [0, 0, 3], sizes = [1, 8, 1], strides = [1, 1, 1]} : vector<1x8x4xf32> to vector<1x8x1xf32>
    %cst_18 = arith.constant 5.000000e-01 : f32
    %57 = vector.broadcast %cst_18 : f32 to vector<1x8x1xf32>
    %58 = arith.mulf %57, %55 : vector<1x8x1xf32>
    %59 = arith.subf %53, %58 : vector<1x8x1xf32>
    %cst_19 = arith.constant 5.000000e-01 : f32
    %60 = vector.broadcast %cst_19 : f32 to vector<1x8x1xf32>
    %61 = arith.mulf %60, %56 : vector<1x8x1xf32>
    %62 = arith.subf %54, %61 : vector<1x8x1xf32>
    %cst_20 = arith.constant 5.000000e-01 : f32
    %63 = vector.broadcast %cst_20 : f32 to vector<1x8x1xf32>
    %64 = arith.mulf %63, %55 : vector<1x8x1xf32>
    %65 = arith.addf %53, %64 : vector<1x8x1xf32>
    %cst_21 = arith.constant 5.000000e-01 : f32
    %66 = vector.broadcast %cst_21 : f32 to vector<1x8x1xf32>
    %67 = arith.mulf %66, %56 : vector<1x8x1xf32>
    %68 = arith.addf %54, %67 : vector<1x8x1xf32>
    %69 = vector.extract_strided_slice %2 {offsets = [0, 0, 0], sizes = [1, 1, 128], strides = [1, 1, 1]} : vector<1x4x128xf32> to vector<1x1x128xf32>
    %70 = vector.extract_strided_slice %2 {offsets = [0, 1, 0], sizes = [1, 1, 128], strides = [1, 1, 1]} : vector<1x4x128xf32> to vector<1x1x128xf32>
    %71 = vector.extract_strided_slice %2 {offsets = [0, 2, 0], sizes = [1, 1, 128], strides = [1, 1, 1]} : vector<1x4x128xf32> to vector<1x1x128xf32>
    %72 = vector.extract_strided_slice %2 {offsets = [0, 3, 0], sizes = [1, 1, 128], strides = [1, 1, 1]} : vector<1x4x128xf32> to vector<1x1x128xf32>
    %cst_22 = arith.constant 5.000000e-01 : f32
    %73 = vector.broadcast %cst_22 : f32 to vector<1x1x128xf32>
    %74 = arith.mulf %73, %71 : vector<1x1x128xf32>
    %75 = arith.subf %69, %74 : vector<1x1x128xf32>
    %cst_23 = arith.constant 5.000000e-01 : f32
    %76 = vector.broadcast %cst_23 : f32 to vector<1x1x128xf32>
    %77 = arith.mulf %76, %72 : vector<1x1x128xf32>
    %78 = arith.subf %70, %77 : vector<1x1x128xf32>
    %cst_24 = arith.constant 5.000000e-01 : f32
    %79 = vector.broadcast %cst_24 : f32 to vector<1x1x128xf32>
    %80 = arith.mulf %79, %71 : vector<1x1x128xf32>
    %81 = arith.addf %69, %80 : vector<1x1x128xf32>
    %cst_25 = arith.constant 5.000000e-01 : f32
    %82 = vector.broadcast %cst_25 : f32 to vector<1x1x128xf32>
    %83 = arith.mulf %82, %72 : vector<1x1x128xf32>
    %84 = arith.addf %70, %83 : vector<1x1x128xf32>
    %85 = arith.subf %65, %59 : vector<1x8x1xf32>
    %86 = arith.subf %68, %62 : vector<1x8x1xf32>
    %87 = arith.mulf %85, %86 : vector<1x8x1xf32>
    %88 = arith.subf %81, %75 : vector<1x1x128xf32>
    %89 = arith.subf %84, %78 : vector<1x1x128xf32>
    %90 = arith.mulf %88, %89 : vector<1x1x128xf32>
    %91 = vector.broadcast %65 : vector<1x8x1xf32> to vector<1x8x128xf32>
    %92 = vector.broadcast %81 : vector<1x1x128xf32> to vector<1x8x128xf32>
    %93 = arith.minimumf %91, %92 : vector<1x8x128xf32>
    %94 = vector.broadcast %59 : vector<1x8x1xf32> to vector<1x8x128xf32>
    %95 = vector.broadcast %75 : vector<1x1x128xf32> to vector<1x8x128xf32>
    %96 = arith.maximumf %94, %95 : vector<1x8x128xf32>
    %97 = arith.subf %93, %96 : vector<1x8x128xf32>
    %cst_26 = arith.constant 0.000000e+00 : f32
    %98 = vector.broadcast %cst_26 : f32 to vector<1x8x128xf32>
    %99 = arith.maximumf %97, %98 : vector<1x8x128xf32>
    %100 = vector.broadcast %68 : vector<1x8x1xf32> to vector<1x8x128xf32>
    %101 = vector.broadcast %84 : vector<1x1x128xf32> to vector<1x8x128xf32>
    %102 = arith.minimumf %100, %101 : vector<1x8x128xf32>
    %103 = vector.broadcast %62 : vector<1x8x1xf32> to vector<1x8x128xf32>
    %104 = vector.broadcast %78 : vector<1x1x128xf32> to vector<1x8x128xf32>
    %105 = arith.maximumf %103, %104 : vector<1x8x128xf32>
    %106 = arith.subf %102, %105 : vector<1x8x128xf32>
    %cst_27 = arith.constant 0.000000e+00 : f32
    %107 = vector.broadcast %cst_27 : f32 to vector<1x8x128xf32>
    %108 = arith.maximumf %106, %107 : vector<1x8x128xf32>
    %109 = arith.mulf %99, %108 : vector<1x8x128xf32>
    %110 = vector.broadcast %87 : vector<1x8x1xf32> to vector<1x8x128xf32>
    %111 = vector.broadcast %90 : vector<1x1x128xf32> to vector<1x8x128xf32>
    %112 = arith.addf %110, %111 : vector<1x8x128xf32>
    %113 = arith.subf %112, %109 : vector<1x8x128xf32>
    %cst_28 = arith.constant 9.99999993E-9 : f32
    %114 = vector.broadcast %cst_28 : f32 to vector<1x8x128xf32>
    %115 = arith.maximumf %113, %114 : vector<1x8x128xf32>
    %116 = tpu.reciprocal %115 {approx = true} : vector<1x8x128xf32> -> vector<1x8x128xf32>
    %117 = arith.mulf %109, %116 : vector<1x8x128xf32>
    %118 = vector.broadcast %65 : vector<1x8x1xf32> to vector<1x8x128xf32>
    %119 = vector.broadcast %81 : vector<1x1x128xf32> to vector<1x8x128xf32>
    %120 = arith.maximumf %118, %119 : vector<1x8x128xf32>
    %121 = vector.broadcast %59 : vector<1x8x1xf32> to vector<1x8x128xf32>
    %122 = vector.broadcast %75 : vector<1x1x128xf32> to vector<1x8x128xf32>
    %123 = arith.minimumf %121, %122 : vector<1x8x128xf32>
    %124 = arith.subf %120, %123 : vector<1x8x128xf32>
    %125 = vector.broadcast %68 : vector<1x8x1xf32> to vector<1x8x128xf32>
    %126 = vector.broadcast %84 : vector<1x1x128xf32> to vector<1x8x128xf32>
    %127 = arith.maximumf %125, %126 : vector<1x8x128xf32>
    %128 = vector.broadcast %62 : vector<1x8x1xf32> to vector<1x8x128xf32>
    %129 = vector.broadcast %78 : vector<1x1x128xf32> to vector<1x8x128xf32>
    %130 = arith.minimumf %128, %129 : vector<1x8x128xf32>
    %131 = arith.subf %127, %130 : vector<1x8x128xf32>
    %132 = arith.mulf %124, %131 : vector<1x8x128xf32>
    %cst_29 = arith.constant 9.99999993E-9 : f32
    %133 = vector.broadcast %cst_29 : f32 to vector<1x8x128xf32>
    %134 = arith.maximumf %132, %133 : vector<1x8x128xf32>
    %135 = arith.subf %134, %113 : vector<1x8x128xf32>
    %136 = tpu.reciprocal %134 {approx = true} : vector<1x8x128xf32> -> vector<1x8x128xf32>
    %137 = arith.mulf %135, %136 : vector<1x8x128xf32>
    %138 = arith.subf %117, %137 : vector<1x8x128xf32>
    %139 = arith.addf %23, %52 : vector<1x8x128xf32>
    %140 = arith.subf %139, %138 : vector<1x8x128xf32>
    %cst_30 = arith.constant 5.000000e-01 : f32
    %141 = vector.broadcast %cst_30 : f32 to vector<1x1x128xf32>
    %142 = arith.cmpf ogt, %4, %141 : vector<1x1x128xf32>
    %cst_31 = arith.constant 1.000000e+09 : f32
    %143 = vector.shape_cast %142 : vector<1x1x128xi1> to vector<1x1x128xi1>
    %144 = vector.broadcast %143 : vector<1x1x128xi1> to vector<1x8x128xi1>
    %145 = vector.broadcast %cst_31 : f32 to vector<1x8x128xf32>
    %146 = arith.select %144, %140, %145 : vector<1x8x128xi1>, vector<1x8x128xf32>
    %c0_32 = arith.constant 0 : index
    %c0_33 = arith.constant 0 : index
    %c0_34 = arith.constant 0 : index
    %147 = vector.load %arg6[%c0_32, %c0_33, %c0_34] : memref<1x8x128xf32, #tpu.memory_space<vmem>>, vector<1x8x128xf32>
    tpu.vector_store %arg6[%c0_32, %c0_33, %c0_34], %146 {strides = array<i32>} : memref<1x8x128xf32, #tpu.memory_space<vmem>>, vector<1x8x128xf32>,
    return
  }
  func.func @transform_0(%arg0: i32) -> (i32, i32, i32) {
    %c0_i32 = arith.constant 0 : i32
    %c0_i32_0 = arith.constant 0 : i32
    %c0_i32_1 = arith.constant 0 : i32
    return %arg0, %c0_i32, %c0_i32_0 : i32, i32, i32
  }
  func.func @transform_1(%arg0: i32) -> (i32, i32, i32) {
    %c0_i32 = arith.constant 0 : i32
    %c0_i32_0 = arith.constant 0 : i32
    %c0_i32_1 = arith.constant 0 : i32
    return %arg0, %c0_i32, %c0_i32_0 : i32, i32, i32
  }
  func.func @transform_2(%arg0: i32) -> (i32, i32, i32) {
    %c0_i32 = arith.constant 0 : i32
    %c0_i32_0 = arith.constant 0 : i32
    %c0_i32_1 = arith.constant 0 : i32
    return %arg0, %c0_i32, %c0_i32_0 : i32, i32, i32
  }
  func.func @transform_3(%arg0: i32) -> (i32, i32, i32) {
    %c0_i32 = arith.constant 0 : i32
    %c0_i32_0 = arith.constant 0 : i32
    %c0_i32_1 = arith.constant 0 : i32
    return %arg0, %c0_i32, %c0_i32_0 : i32, i32, i32
  }
  func.func @transform_4(%arg0: i32) -> (i32, i32, i32) {
    %c0_i32 = arith.constant 0 : i32
    %c0_i32_0 = arith.constant 0 : i32
    %c0_i32_1 = arith.constant 0 : i32
    return %arg0, %c0_i32, %c0_i32_0 : i32, i32, i32
  }
  func.func @transform_5(%arg0: i32) -> (i32, i32, i32) {
    %c0_i32 = arith.constant 0 : i32
    %c0_i32_0 = arith.constant 0 : i32
    %c0_i32_1 = arith.constant 0 : i32
    return %arg0, %c0_i32, %c0_i32_0 : i32, i32, i32
  }
}

</mosaic_0001>

<llo_original>
// kernel: tpu_custom_call.1
$region0: #{tpu_custom_call.1}
  #allocation0 [shape = 'u32[]', space=smem, size = 0x4, offset = 0x4, fixed_abs, tag = 'smem constant byte address 0x4 - core index']
  #allocation1 [shape = 'u32[144,128]{1,0:T(1,128)}', space=vmem, size = 0x12000, scoped, tag = 'internal scratch']
  %s0 = inlined_call_operand.vmem [shape: f32[2,8,128], index: 0, kind: input, shape index: {}]
  %s1 = inlined_call_operand.vmem [shape: f32[2,8,4], index: 1, kind: input, shape index: {}]
  %s2 = inlined_call_operand.vmem [shape: f32[2,4,128], index: 2, kind: input, shape index: {}]
  %s3 = inlined_call_operand.vmem [shape: s32[2,1,128], index: 3, kind: input, shape index: {}]
  %s4 = inlined_call_operand.vmem [shape: f32[2,1,128], index: 4, kind: input, shape index: {}]
  %s5 = inlined_call_operand.hbm [shape: f32[2,8,128], index: 5, kind: output, shape index: {}]
  %s6 = sld [smem:[#allocation0]]
  $region53: #{tpu_custom_call.1} parent=0
    _
  %s8 = ssub.s32 1, %s6
  %s9 = scalar_select 0, %s8, %s6
  $region1: #{tpu_custom_call.1} parent=0
    #allocation2 [shape = 'u8[8192]{0}', space=vmem, size = 0x2000, scoped, tag = 'output window, operand 0']
    #allocation3 [shape = 's32[2]{0}', space=sflag, size = 0x8, scoped, tag = 'scoped memory for tpu_custom_call.1']
    %10 = vsyncpa [#allocation3], 0
    %s11 = scalar_lea.sflag [#allocation3], 1
    %12 = vsyncpa %s11, 0
    loop: start=0, step=1, limit=4
    $region2: #{tpu_custom_call.1} parent=1 // loop_pre_header
      _
    $region3: #{tpu_custom_call.1} parent=1 // loop_header
      %s14 = sphi 0, %s18
      %p15 = scmp.ge.s32.totalorder %s14, 4
      %s24 = sphi 0, %s26
      %s27 = sphi 0, %s24
      %s28 = sphi 0, %s27
      %s44 = sphi 0, %s28
      %s50 = sphi 0, %s52
      %s53 = sphi 0, %s50
      %s54 = sphi 0, %s53
      %s70 = sphi 0, %s54
      %s76 = sphi 0, %s78
      %s79 = sphi 0, %s76
      %s80 = sphi 0, %s79
      %s96 = sphi 0, %s80
      %s102 = sphi 0, %s104
      %s105 = sphi 0, %s102
      %s106 = sphi 0, %s105
      %s122 = sphi 0, %s106
      %s128 = sphi 0, %s130
      %s131 = sphi 0, %s128
      %s132 = sphi 0, %s131
      %s148 = sphi 0, %s132
      %s154 = sphi 0, %s156
      %s157 = sphi 0, %s154
      %s158 = sphi 0, %s157
      %s174 = sphi 0, %s158
    $region4: #{tpu_custom_call.1} parent=1 // loop_header_branch
      %17 = sbr.rel (%p15) target = $region8
    $region5: #{tpu_custom_call.1} parent=1 // loop_body
      %s19 = ssub.s32 %s14, 1
      %s20 = ssub.s32 %s14, 2
      %s21 = sadd.s32 %s14, 1
      %s22 = ssub.s32 %s14, %s21
      %p23 = scmp.eq.s32.totalorder %s22, 0
      %s25 = sadd.s32 %s24, 1
      %s26 = scalar_select %p23, %s24, %s25
      %p29 = pneg %p23
      %p30 = scmp.eq.s32.totalorder %s14, 1
      %p31 = por %p29, %p30
      %p32 = scmp.ne.s32.totalorder %s24, %s27
      %p33 = scmp.eq.s32.totalorder %s14, 0
      %p34 = por %p32, %p33
      %p35 = scmp.ne.s32.totalorder %s24, %s27
      %p36 = scmp.eq.s32.totalorder %s19, 1
      %p37 = por %p35, %p36
      %p38 = scmp.ne.s32.totalorder %s27, %s28
      %p39 = scmp.eq.s32.totalorder %s19, 0
      %p40 = por %p38, %p39
      %p41 = scmp.ne.s32.totalorder %s27, %s28
      %p42 = scmp.eq.s32.totalorder %s20, 1
      %p43 = por %p41, %p42
      %p45 = scmp.ne.s32.totalorder %s28, %s44
      %p46 = scmp.eq.s32.totalorder %s20, 0
      %p47 = por %p45, %p46
      %s48 = ssub.s32 %s14, %s21
      %p49 = scmp.eq.s32.totalorder %s48, 0
      %s51 = sadd.s32 %s50, 1
      %s52 = scalar_select %p49, %s50, %s51
      %p55 = pneg %p49
      %p56 = scmp.eq.s32.totalorder %s14, 1
      %p57 = por %p55, %p56
      %p58 = scmp.ne.s32.totalorder %s50, %s53
      %p59 = scmp.eq.s32.totalorder %s14, 0
      %p60 = por %p58, %p59
      %p61 = scmp.ne.s32.totalorder %s50, %s53
      %p62 = scmp.eq.s32.totalorder %s19, 1
      %p63 = por %p61, %p62
      %p64 = scmp.ne.s32.totalorder %s53, %s54
      %p65 = scmp.eq.s32.totalorder %s19, 0
      %p66 = por %p64, %p65
      %p67 = scmp.ne.s32.totalorder %s53, %s54
      %p68 = scmp.eq.s32.totalorder %s20, 1
      %p69 = por %p67, %p68
      %p71 = scmp.ne.s32.totalorder %s54, %s70
      %p72 = scmp.eq.s32.totalorder %s20, 0
      %p73 = por %p71, %p72
      %s74 = ssub.s32 %s14, %s21
      %p75 = scmp.eq.s32.totalorder %s74, 0
      %s77 = sadd.s32 %s76, 1
      %s78 = scalar_select %p75, %s76, %s77
      %p81 = pneg %p75
      %p82 = scmp.eq.s32.totalorder %s14, 1
      %p83 = por %p81, %p82
      %p84 = scmp.ne.s32.totalorder %s76, %s79
      %p85 = scmp.eq.s32.totalorder %s14, 0
      %p86 = por %p84, %p85
      %p87 = scmp.ne.s32.totalorder %s76, %s79
      %p88 = scmp.eq.s32.totalorder %s19, 1
      %p89 = por %p87, %p88
      %p90 = scmp.ne.s32.totalorder %s79, %s80
      %p91 = scmp.eq.s32.totalorder %s19, 0
      %p92 = por %p90, %p91
      %p93 = scmp.ne.s32.totalorder %s79, %s80
      %p94 = scmp.eq.s32.totalorder %s20, 1
      %p95 = por %p93, %p94
      %p97 = scmp.ne.s32.totalorder %s80, %s96
      %p98 = scmp.eq.s32.totalorder %s20, 0
      %p99 = por %p97, %p98
      %s100 = ssub.s32 %s14, %s21
      %p101 = scmp.eq.s32.totalorder %s100, 0
      %s103 = sadd.s32 %s102, 1
      %s104 = scalar_select %p101, %s102, %s103
      %p107 = pneg %p101
      %p108 = scmp.eq.s32.totalorder %s14, 1
      %p109 = por %p107, %p108
      %p110 = scmp.ne.s32.totalorder %s102, %s105
      %p111 = scmp.eq.s32.totalorder %s14, 0
      %p112 = por %p110, %p111
      %p113 = scmp.ne.s32.totalorder %s102, %s105
      %p114 = scmp.eq.s32.totalorder %s19, 1
      %p115 = por %p113, %p114
      %p116 = scmp.ne.s32.totalorder %s105, %s106
      %p117 = scmp.eq.s32.totalorder %s19, 0
      %p118 = por %p116, %p117
      %p119 = scmp.ne.s32.totalorder %s105, %s106
      %p120 = scmp.eq.s32.totalorder %s20, 1
      %p121 = por %p119, %p120
      %p123 = scmp.ne.s32.totalorder %s106, %s122
      %p124 = scmp.eq.s32.totalorder %s20, 0
      %p125 = por %p123, %p124
      %s126 = ssub.s32 %s14, %s21
      %p127 = scmp.eq.s32.totalorder %s126, 0
      %s129 = sadd.s32 %s128, 1
      %s130 = scalar_select %p127, %s128, %s129
      %p133 = pneg %p127
      %p134 = scmp.eq.s32.totalorder %s14, 1
      %p135 = por %p133, %p134
      %p136 = scmp.ne.s32.totalorder %s128, %s131
      %p137 = scmp.eq.s32.totalorder %s14, 0
      %p138 = por %p136, %p137
      %p139 = scmp.ne.s32.totalorder %s128, %s131
      %p140 = scmp.eq.s32.totalorder %s19, 1
      %p141 = por %p139, %p140
      %p142 = scmp.ne.s32.totalorder %s131, %s132
      %p143 = scmp.eq.s32.totalorder %s19, 0
      %p144 = por %p142, %p143
      %p145 = scmp.ne.s32.totalorder %s131, %s132
      %p146 = scmp.eq.s32.totalorder %s20, 1
      %p147 = por %p145, %p146
      %p149 = scmp.ne.s32.totalorder %s132, %s148
      %p150 = scmp.eq.s32.totalorder %s20, 0
      %p151 = por %p149, %p150
      %s152 = ssub.s32 %s14, %s21
      %p153 = scmp.eq.s32.totalorder %s152, 0
      %s155 = sadd.s32 %s154, 1
      %s156 = scalar_select %p153, %s154, %s155
      %p159 = pneg %p153
      %p160 = scmp.eq.s32.totalorder %s14, 1
      %p161 = por %p159, %p160
      %p162 = scmp.ne.s32.totalorder %s154, %s157
      %p163 = scmp.eq.s32.totalorder %s14, 0
      %p164 = por %p162, %p163
      %p165 = scmp.ne.s32.totalorder %s154, %s157
      %p166 = scmp.eq.s32.totalorder %s19, 1
      %p167 = por %p165, %p166
      %p168 = scmp.ne.s32.totalorder %s157, %s158
      %p169 = scmp.eq.s32.totalorder %s19, 0
      %p170 = por %p168, %p169
      %p171 = scmp.ne.s32.totalorder %s157, %s158
      %p172 = scmp.eq.s32.totalorder %s20, 1
      %p173 = por %p171, %p172
      %p175 = scmp.ne.s32.totalorder %s158, %s174
      %p176 = scmp.eq.s32.totalorder %s20, 0
      %p177 = por %p175, %p176
      %p178 = scmp.le.s32.totalorder 1, %s14
      %p179 = scmp.lt.s32.totalorder %s14, 3
      %p180 = pnand %p178, %p179
      %p181 = pneg %p180
      // Predicated region
      $region9: #{tpu_custom_call.1} parent=5 // pred_check
        _
      $region10: #{tpu_custom_call.1} parent=5 // pred_check_branch
        %183 = sbr.rel (%p180) target = $region12
      $region11: #{tpu_custom_call.1} parent=5 // pred_region
        %s184 = ssub.s32 %s14, 1
      $region12: #{tpu_custom_call.1} parent=5 // pred_fallthru
        _
      %p185 = scmp.lt.s32.totalorder %s14, 2
      // Predicated region
      $region13: #{tpu_custom_call.1} parent=5 // pred_check
        %p186 = pneg %p185
      $region14: #{tpu_custom_call.1} parent=5 // pred_check_branch
        %188 = sbr.rel (%p186) target = $region16
      $region15: #{tpu_custom_call.1} parent=5 // pred_region
        // Predicated region
        $region17: #{tpu_custom_call.1} parent=15 // pred_check
          %p189 = pneg %p34
        $region18: #{tpu_custom_call.1} parent=15 // pred_check_branch
          %191 = sbr.rel (%p189) target = $region20
        $region19: #{tpu_custom_call.1} parent=15 // pred_region
          %p192 = scmp.lt.s32.totalorder %s14, 1
          %s193 = scalar_select %p192, %s14, 1
          %s194 = smul.addr %s193, 8
          %s195 = scalar_lea.vmem %s0, %s194
        $region20: #{tpu_custom_call.1} parent=15 // pred_fallthru
          _
        // Predicated region
        $region21: #{tpu_custom_call.1} parent=15 // pred_check
          %p196 = pneg %p60
        $region22: #{tpu_custom_call.1} parent=15 // pred_check_branch
          %198 = sbr.rel (%p196) target = $region24
        $region23: #{tpu_custom_call.1} parent=15 // pred_region
          %p199 = scmp.lt.s32.totalorder %s14, 1
          %s200 = scalar_select %p199, %s14, 1
          %s201 = smul.addr %s200, 8
          %s202 = scalar_lea.vmem %s1, %s201
        $region24: #{tpu_custom_call.1} parent=15 // pred_fallthru
          _
        // Predicated region
        $region25: #{tpu_custom_call.1} parent=15 // pred_check
          %p203 = pneg %p86
        $region26: #{tpu_custom_call.1} parent=15 // pred_check_branch
          %205 = sbr.rel (%p203) target = $region28
        $region27: #{tpu_custom_call.1} parent=15 // pred_region
          %p206 = scmp.lt.s32.totalorder %s14, 1
          %s207 = scalar_select %p206, %s14, 1
          %s208 = smul.addr %s207, 4
          %s209 = scalar_lea.vmem %s2, %s208
        $region28: #{tpu_custom_call.1} parent=15 // pred_fallthru
          _
        // Predicated region
        $region29: #{tpu_custom_call.1} parent=15 // pred_check
          %p210 = pneg %p112
        $region30: #{tpu_custom_call.1} parent=15 // pred_check_branch
          %212 = sbr.rel (%p210) target = $region32
        $region31: #{tpu_custom_call.1} parent=15 // pred_region
          %p213 = scmp.lt.s32.totalorder %s14, 1
          %s214 = scalar_select %p213, %s14, 1
          %s215 = scalar_lea.vmem %s3, %s214
        $region32: #{tpu_custom_call.1} parent=15 // pred_fallthru
          _
        // Predicated region
        $region33: #{tpu_custom_call.1} parent=15 // pred_check
          %p216 = pneg %p138
        $region34: #{tpu_custom_call.1} parent=15 // pred_check_branch
          %218 = sbr.rel (%p216) target = $region36
        $region35: #{tpu_custom_call.1} parent=15 // pred_region
          %p219 = scmp.lt.s32.totalorder %s14, 1
          %s220 = scalar_select %p219, %s14, 1
          %s221 = scalar_lea.vmem %s4, %s220
        $region36: #{tpu_custom_call.1} parent=15 // pred_fallthru
          _
      $region16: #{tpu_custom_call.1} parent=5 // pred_fallthru
        _
      %p222 = scmp.le.s32.totalorder 1, %s14
      %p223 = scmp.lt.s32.totalorder %s14, 3
      %p224 = pnand %p222, %p223
      %p225 = pneg %p224
      // Predicated region
      $region37: #{tpu_custom_call.1} parent=5 // pred_check
        _
      $region38: #{tpu_custom_call.1} parent=5 // pred_check_branch
        %227 = sbr.rel (%p224) target = $region40
      $region39: #{tpu_custom_call.1} parent=5 // pred_region
        %s228 = ssub.s32 %s14, 1
        %p229 = scmp.lt.s32.totalorder %s19, 1
        %s230 = scalar_select %p229, %s19, 1
        %s231 = smul.addr %s230, 8
        %s232 = scalar_lea.vmem %s0, %s231
        %p233 = pneg %p40
        %p234 = pneg %p37
        %p235 = scmp.lt.s32.totalorder %s19, 1
        %s236 = scalar_select %p235, %s19, 1
        %s237 = smul.addr %s236, 8
        %s238 = scalar_lea.vmem %s1, %s237
        %p239 = pneg %p66
        %p240 = pneg %p63
        %p241 = scmp.lt.s32.totalorder %s19, 1
        %s242 = scalar_select %p241, %s19, 1
        %s243 = smul.addr %s242, 4
        %s244 = scalar_lea.vmem %s2, %s243
        %p245 = pneg %p92
        %p246 = pneg %p89
        %p247 = scmp.lt.s32.totalorder %s19, 1
        %s248 = scalar_select %p247, %s19, 1
        %s249 = scalar_lea.vmem %s3, %s248
        %p250 = pneg %p118
        %p251 = pneg %p115
        %p252 = scmp.lt.s32.totalorder %s19, 1
        %s253 = scalar_select %p252, %s19, 1
        %s254 = scalar_lea.vmem %s4, %s253
        %p255 = pneg %p144
        %p256 = pneg %p141
        %p257 = pneg %p170
        %p258 = pneg %p167
        %s259 = sand.u32 %s157, 1
        %s260 = scalar_lea.sflag [#allocation3], %s259
        %s261 = sand.u32 %s157, 1
        %s262 = smul.addr %s261, 8
        %s263 = scalar_lea.vmem [#allocation2], %s262
        %p264 = scmp.lt.s32.totalorder %s19, 1
        %s265 = scalar_select %p264, %s19, 1
        %s266 = smul.addr %s265, 8
        %s267 = scalar_lea.vmem %s0, %s266
        %p268 = scmp.lt.s32.totalorder %s19, 1
        %s269 = scalar_select %p268, %s19, 1
        %s270 = smul.addr %s269, 8
        %s271 = scalar_lea.vmem %s1, %s270
        %p272 = scmp.lt.s32.totalorder %s19, 1
        %s273 = scalar_select %p272, %s19, 1
        %s274 = smul.addr %s273, 4
        %s275 = scalar_lea.vmem %s2, %s274
        %p276 = scmp.lt.s32.totalorder %s19, 1
        %s277 = scalar_select %p276, %s19, 1
        %s278 = scalar_lea.vmem %s3, %s277
        %p279 = scmp.lt.s32.totalorder %s19, 1
        %s280 = scalar_select %p279, %s19, 1
        %s281 = scalar_lea.vmem %s4, %s280
        %v282 = vld [vmem:[%s267] sm:$0xff]
        %v283 = vld [vmem:[%s271] sm:$0xff]
        %v284 = vld [vmem:[%s275] sm:$0xf]
        %v285 = vld [vmem:[%s278] sm:$0x1]
        %v286 = vld [vmem:[%s281] sm:$0x1]
        %287 = vmax.xlane.f32.xlu0 %v282
        %v288 = vpop.xlane.xlu0 %287
        %v289 = vsub.f32 %v282, %v288
        %v290 = vmul.f32 %v289, 1.442695
        %v291 = vpow.pop %v290
        %292 = vadd.xlane.f32.xlu0 %v291
        %v293 = vpop.xlane.xlu0 %292
        %v294 = vrcp.pop %v293
        %v295 = vmul.f32 %v291, %v294
        %v296 = vlaneseq
        %v297 = vshrl.u32 %v296, 7
        %v298 = vadd.s32 %v297, 8
        %v299 = vadd.s32 %v297, 16
        %v300 = vadd.s32 %v297, 24
        %v301 = vadd.s32 %v297, 32
        %v302 = vadd.s32 %v297, 40
        %v303 = vadd.s32 %v297, 48
        %v304 = vadd.s32 %v297, 56
        %v305 = vadd.s32 %v297, 64
        %v306 = vadd.s32 %v297, 72
        %v307 = vadd.s32 %v297, 80
        %v308 = vadd.s32 %v297, 88
        %v309 = vadd.s32 %v297, 96
        %v310 = vadd.s32 %v297, 104
        %v311 = vadd.s32 %v297, 112
        %v312 = vadd.s32 %v297, 120
        %v313 = vlaneseq
        %v314 = vshrl.u32 %v313, 7
        %v315 = vsub.s32 0, %v314
        %v316 = vrot.slane %v285, %v315
        %vm317 = vcmp.eq.s32.totalorder %v297, %v316
        %vm318 = vcmp.eq.s32.totalorder %v298, %v316
        %vm319 = vcmp.eq.s32.totalorder %v299, %v316
        %vm320 = vcmp.eq.s32.totalorder %v300, %v316
        %vm321 = vcmp.eq.s32.totalorder %v301, %v316
        %vm322 = vcmp.eq.s32.totalorder %v302, %v316
        %vm323 = vcmp.eq.s32.totalorder %v303, %v316
        %vm324 = vcmp.eq.s32.totalorder %v304, %v316
        %vm325 = vcmp.eq.s32.totalorder %v305, %v316
        %vm326 = vcmp.eq.s32.totalorder %v306, %v316
        %vm327 = vcmp.eq.s32.totalorder %v307, %v316
        %vm328 = vcmp.eq.s32.totalorder %v308, %v316
        %vm329 = vcmp.eq.s32.totalorder %v309, %v316
        %vm330 = vcmp.eq.s32.totalorder %v310, %v316
        %vm331 = vcmp.eq.s32.totalorder %v311, %v316
        %vm332 = vcmp.eq.s32.totalorder %v312, %v316
        %v333 = vsel %vm317, 1, 0
        %v334 = vsel %vm318, 1, 0
        %v335 = vsel %vm319, 1, 0
        %v336 = vsel %vm320, 1, 0
        %v337 = vsel %vm321, 1, 0
        %v338 = vsel %vm322, 1, 0
        %v339 = vsel %vm323, 1, 0
        %v340 = vsel %vm324, 1, 0
        %v341 = vsel %vm325, 1, 0
        %v342 = vsel %vm326, 1, 0
        %v343 = vsel %vm327, 1, 0
        %v344 = vsel %vm328, 1, 0
        %v345 = vsel %vm329, 1, 0
        %v346 = vsel %vm330, 1, 0
        %v347 = vsel %vm331, 1, 0
        %v348 = vsel %vm332, 1, 0
        %v349 = vcvt.s32.f32 %v333
        %v350 = vcvt.s32.f32 %v334
        %v351 = vcvt.s32.f32 %v335
        %v352 = vcvt.s32.f32 %v336
        %v353 = vcvt.s32.f32 %v337
        %v354 = vcvt.s32.f32 %v338
        %v355 = vcvt.s32.f32 %v339
        %v356 = vcvt.s32.f32 %v340
        %v357 = vcvt.s32.f32 %v341
        %v358 = vcvt.s32.f32 %v342
        %v359 = vcvt.s32.f32 %v343
        %v360 = vcvt.s32.f32 %v344
        %v361 = vcvt.s32.f32 %v345
        %v362 = vcvt.s32.f32 %v346
        %v363 = vcvt.s32.f32 %v347
        %v364 = vcvt.s32.f32 %v348
        %365 = vmatprep.subr.mxu0 0.0
        %366 = vmatpush1.msra.mxu0 %v364
        %367 = vmatprep.subr.mxu0 0.0
        %368 = vmatpush1.msra.mxu0 %v363
        %369 = vmatprep.subr.mxu0 0.0
        %370 = vmatpush1.msra.mxu0 %v362
        %371 = vmatprep.subr.mxu0 0.0
        %372 = vmatpush1.msra.mxu0 %v361
        %373 = vmatprep.subr.mxu0 0.0
        %374 = vmatpush1.msra.mxu0 %v360
        %375 = vmatprep.subr.mxu0 0.0
        %376 = vmatpush1.msra.mxu0 %v359
        %377 = vmatprep.subr.mxu0 0.0
        %378 = vmatpush1.msra.mxu0 %v358
        %379 = vmatprep.subr.mxu0 0.0
        %380 = vmatpush1.msra.mxu0 %v357
        %381 = vmatprep.subr.mxu0 0.0
        %382 = vmatpush1.msra.mxu0 %v356
        %383 = vmatprep.subr.mxu0 0.0
        %384 = vmatpush1.msra.mxu0 %v355
        %385 = vmatprep.subr.mxu0 0.0
        %386 = vmatpush1.msra.mxu0 %v354
        %387 = vmatprep.subr.mxu0 0.0
        %388 = vmatpush1.msra.mxu0 %v353
        %389 = vmatprep.subr.mxu0 0.0
        %390 = vmatpush1.msra.mxu0 %v352
        %391 = vmatprep.subr.mxu0 0.0
        %392 = vmatpush1.msra.mxu0 %v351
        %393 = vmatprep.subr.mxu0 0.0
        %394 = vmatpush1.msra.mxu0 %v350
        %395 = vmatprep.subr.mxu0 0.0
        %396 = vmatpush1.msra.mxu0 %v349
        %397 = vmatprep.subr.mxu0 0.0
        %398 = vmatpush2.msra.mxu0 0.0
        %399 = vmatprep.subr.mxu0 0.0
        %400 = vmatpush2.msra.mxu0 0.0
        %401 = vmatprep.subr.mxu0 0.0
        %402 = vmatpush2.msra.mxu0 0.0
        %403 = vmatprep.subr.mxu0 0.0
        %404 = vmatpush2.msra.mxu0 0.0
        %405 = vmatprep.subr.mxu0 0.0
        %406 = vmatpush2.msra.mxu0 0.0
        %407 = vmatprep.subr.mxu0 0.0
        %408 = vmatpush2.msra.mxu0 0.0
        %409 = vmatprep.subr.mxu0 0.0
        %410 = vmatpush2.msra.mxu0 0.0
        %411 = vmatprep.subr.mxu0 0.0
        %412 = vmatpush2.msra.mxu0 0.0
        %413 = vmatprep.subr.mxu0 0.0
        %414 = vmatpush2.msra.mxu0 0.0
        %415 = vmatprep.subr.mxu0 0.0
        %416 = vmatpush2.msra.mxu0 0.0
        %417 = vmatprep.subr.mxu0 0.0
        %418 = vmatpush2.msra.mxu0 0.0
        %419 = vmatprep.subr.mxu0 0.0
        %420 = vmatpush2.msra.mxu0 0.0
        %421 = vmatprep.subr.mxu0 0.0
        %422 = vmatpush2.msra.mxu0 0.0
        %423 = vmatprep.subr.mxu0 0.0
        %424 = vmatpush2.msra.mxu0 0.0
        %425 = vmatprep.subr.mxu0 0.0
        %426 = vmatpush2.msra.mxu0 0.0
        %427 = vmatprep.subr.mxu0 0.0
        %428 = vmatpush2.msra.mxu0 0.0
        %429 = vmatprep.mubr.f32.mxu0 0.0
        %430 = vmatmul.mubr.f32.gmra.mxu0 %v295
        %v431 = vpop.f32.mrf.mxu0
        %v432 = vadd.f32 0.0, %v431
        %v433 = vpop.f32.mrf.mxu0
        %434 = vdwg.mxu0
        %v435 = vsub.f32 0.0, %v432
        %437 = vset.pattern.permute.xlu0 0
        %438 = vperm.xlu0 %437, %v283
        %v439 = vpop.permute.xlu0 %438
        %v441 = vlaneseq
        %v442 = vshrl.u32 %v441, 7
        %v443 = vsub.s32 0, %v442
        %v444 = vrot.slane %v284, %v443
        %v445 = vsub.f32 %v439, %v444
        %v446 = vand.u32 2147483647, %v445
        %v447 = vadd.f32 %v446, 0.0
        %448 = vset.pattern.permute.xlu0 1
        %449 = vperm.xlu0 %448, %v283
        %v450 = vpop.permute.xlu0 %449
        %v452 = vlaneseq
        %v453 = vshrl.u32 %v452, 7
        %v454 = vsub.s32 1, %v453
        %v455 = vrot.slane %v284, %v454
        %v456 = vsub.f32 %v450, %v455
        %v457 = vand.u32 2147483647, %v456
        %v458 = vadd.f32 %v447, %v457
        %459 = vset.pattern.permute.xlu0 2
        %460 = vperm.xlu0 %459, %v283
        %v461 = vpop.permute.xlu0 %460
        %v463 = vlaneseq
        %v464 = vshrl.u32 %v463, 7
        %v465 = vsub.s32 2, %v464
        %v466 = vrot.slane %v284, %v465
        %v467 = vsub.f32 %v461, %v466
        %v468 = vand.u32 2147483647, %v467
        %v469 = vadd.f32 %v458, %v468
        %470 = vset.pattern.permute.xlu0 3
        %471 = vperm.xlu0 %470, %v283
        %v472 = vpop.permute.xlu0 %471
        %v474 = vlaneseq
        %v475 = vshrl.u32 %v474, 7
        %v476 = vsub.s32 3, %v475
        %v477 = vrot.slane %v284, %v476
        %v478 = vsub.f32 %v472, %v477
        %v479 = vand.u32 2147483647, %v478
        %v480 = vadd.f32 %v469, %v479
        %v481 = vmul.f32 %v283, 0.5
        %483 = vrot.lane.b32.xlu0 %v481, 126
        %v484 = vpop.permute.xlu0 %483
        %v486 = vsub.f32 %v283, %v484
        %v487 = vadd.f32 %v283, %v484
        %v488 = vmul.f32 %v284, 0.5
        %v490 = vrot.slane %v488, 2
        %v492 = vsub.f32 %v284, %v490
        %v493 = vadd.f32 %v284, %v490
        %v494 = vsub.f32 %v487, %v486
        %496 = vrot.lane.b32.xlu0 %v494, 127
        %v497 = vpop.permute.xlu0 %496
        %v499 = vmul.f32 %v494, %v497
        %v500 = vsub.f32 %v493, %v492
        %v502 = vrot.slane %v500, 1
        %v504 = vmul.f32 %v500, %v502
        %506 = vset.pattern.permute.xlu0 0
        %507 = vperm.xlu0 %506, %v487
        %v508 = vpop.permute.xlu0 %507
        %v510 = vlaneseq
        %v511 = vshrl.u32 %v510, 7
        %v512 = vsub.s32 0, %v511
        %v513 = vrot.slane %v493, %v512
        %v514 = vmin.f32 %v508, %v513
        %516 = vset.pattern.permute.xlu0 0
        %517 = vperm.xlu0 %516, %v486
        %v518 = vpop.permute.xlu0 %517
        %v520 = vlaneseq
        %v521 = vshrl.u32 %v520, 7
        %v522 = vsub.s32 0, %v521
        %v523 = vrot.slane %v492, %v522
        %v524 = vmax.f32 %v518, %v523
        %v525 = vsub.f32 %v514, %v524
        %v526 = vmax.f32 %v525, 0.0
        %527 = vset.pattern.permute.xlu0 1
        %528 = vperm.xlu0 %527, %v487
        %v529 = vpop.permute.xlu0 %528
        %v531 = vlaneseq
        %v532 = vshrl.u32 %v531, 7
        %v533 = vsub.s32 1, %v532
        %v534 = vrot.slane %v493, %v533
        %v535 = vmin.f32 %v529, %v534
        %536 = vset.pattern.permute.xlu0 1
        %537 = vperm.xlu0 %536, %v486
        %v538 = vpop.permute.xlu0 %537
        %v540 = vlaneseq
        %v541 = vshrl.u32 %v540, 7
        %v542 = vsub.s32 1, %v541
        %v543 = vrot.slane %v492, %v542
        %v544 = vmax.f32 %v538, %v543
        %v545 = vsub.f32 %v535, %v544
        %v546 = vmax.f32 %v545, 0.0
        %v547 = vmul.f32 %v526, %v546
        %549 = vset.pattern.permute.xlu0 0
        %550 = vperm.xlu0 %549, %v499
        %v551 = vpop.permute.xlu0 %550
        %v553 = vlaneseq
        %v554 = vshrl.u32 %v553, 7
        %v555 = vsub.s32 0, %v554
        %v556 = vrot.slane %v504, %v555
        %v557 = vadd.f32 %v551, %v556
        %v558 = vsub.f32 %v557, %v547
        %v559 = vmax.f32 %v558, 1e-08
        %v560 = vrcp.pop %v559
        %v561 = vmul.f32 %v547, %v560
        %v562 = vmax.f32 %v508, %v513
        %v563 = vmin.f32 %v518, %v523
        %v564 = vsub.f32 %v562, %v563
        %v565 = vmax.f32 %v529, %v534
        %v566 = vmin.f32 %v538, %v543
        %v567 = vsub.f32 %v565, %v566
        %v568 = vmul.f32 %v564, %v567
        %v569 = vmax.f32 %v568, 1e-08
        %v570 = vsub.f32 %v569, %v558
        %v571 = vrcp.pop %v569
        %v572 = vmul.f32 %v570, %v571
        %v573 = vsub.f32 %v561, %v572
        %v574 = vadd.f32 %v435, %v480
        %v575 = vsub.f32 %v574, %v573
        %vm576 = vcmp.gt.f32.partialorder %v286, 0.5
        %v577 = vsel %vm576, 1, 0
        %v578 = vlaneseq
        %v579 = vshrl.u32 %v578, 7
        %v580 = vsub.s32 0, %v579
        %v581 = vrot.slane %v577, %v580
        %vm582 = vcmp.eq.s32.totalorder %v581, 1
        %v583 = vsel %vm582, %v575, 1e+09
        %584 = vst [vmem:[%s263] sm:$0xff] %v583
        %s585 = sand.u32 %s157, 1
        %s586 = scalar_lea.sflag [#allocation3], %s585
        %s587 = sand.u32 %s157, 1
        %s588 = smul.addr %s587, 8
        %s589 = scalar_lea.vmem [#allocation2], %s588
        // Predicated region
        $region41: #{tpu_custom_call.1} parent=39 // pred_check
          %p590 = pneg %p167
        $region42: #{tpu_custom_call.1} parent=39 // pred_check_branch
          %592 = sbr.rel (%p590) target = $region44
        $region43: #{tpu_custom_call.1} parent=39 // pred_region
          %s594 = ssub.s32 128, 128
          %595 = vsyncadd %s586, %s594
          %s596 = smul.addr %s19, 128
          %s597 = scalar_lea.hbm %s5, %s596
          %s599 = sshll.u32 %s589, 4
          %s600 = int_to_ptr.vmem [resolvable:$true] %s599
          %602 = dma.vmem_to_hbm [thread:$0]  %s600, 128, %s597, %s586
        $region44: #{tpu_custom_call.1} parent=39 // pred_fallthru
          _
      $region40: #{tpu_custom_call.1} parent=5 // pred_fallthru
        _
      %p603 = scmp.le.s32.totalorder 2, %s14
      // Predicated region
      $region45: #{tpu_custom_call.1} parent=5 // pred_check
        %p604 = pneg %p603
      $region46: #{tpu_custom_call.1} parent=5 // pred_check_branch
        %606 = sbr.rel (%p604) target = $region48
      $region47: #{tpu_custom_call.1} parent=5 // pred_region
        %s607 = ssub.s32 %s14, 2
        // Predicated region
        $region49: #{tpu_custom_call.1} parent=47 // pred_check
          %p608 = pneg %p173
        $region50: #{tpu_custom_call.1} parent=47 // pred_check_branch
          %610 = sbr.rel (%p608) target = $region52
        $region51: #{tpu_custom_call.1} parent=47 // pred_region
          %s611 = sand.u32 %s158, 1
          %s612 = scalar_lea.sflag [#allocation3], %s611
          %s613 = sand.u32 %s158, 1
          %s614 = smul.addr %s613, 8
          %s615 = scalar_lea.vmem [#allocation2], %s614
          %616 = dma.done %s612, 128
        $region52: #{tpu_custom_call.1} parent=47 // pred_fallthru
          _
      $region48: #{tpu_custom_call.1} parent=5 // pred_fallthru
        _
    $region6: #{tpu_custom_call.1} parent=1 // loop_footer
      %s18 = sadd.s32 1, %s14
    $region7: #{tpu_custom_call.1} parent=1 // loop_footer_branch
      %13 = sbr.rel target = $region3
    $region8: #{tpu_custom_call.1} parent=1 // loop_exit
      _
    %617 = vsyncpa [#allocation3], 1
    %s618 = scalar_lea.sflag [#allocation3], 1
    %619 = vsyncpa %s618, 1

</llo_original>
